<compile_context>
chip_gen: v5e
topology: v5e:2x2
jax: 0.10.0
libtpu: 0.0.40
codegen_flags: <defaults>
</compile_context>

<pallas_src>
import functools

import jax
import jax.numpy as jnp
from jax import lax
from jax.experimental import pallas as pl
from jax.experimental.pallas import tpu as pltpu

_IN_EPS = 1e-5     # nn.InstanceNorm2d default eps
_L2_EPS = 1e-12    # F.normalize default eps


# ---------------------------------------------------------------------------
# In-kernel helpers
# ---------------------------------------------------------------------------
def _l2_normalize_groups(xn, n_samples, C):
    """Per-sample (groups of C consecutive rows), per-column L2 normalization
    of a (n_samples * C, cols) block of instance-normalized values."""
    rows = xn.shape[0]
    sq = xn * xn
    if n_samples == 1:
        ss = jnp.sum(sq, axis=0, keepdims=True)                      # (1, cols)
        inv = lax.rsqrt(jnp.maximum(ss, _L2_EPS * _L2_EPS))
        return xn * inv
    # Group reduction over channels on the (otherwise idle) MXU:
    #   agg[s, r] = 1 iff row r belongs to sample s (block-diagonal ones).
    r_i = lax.broadcasted_iota(jnp.int32, (n_samples, rows), 1)
    s_i = lax.broadcasted_iota(jnp.int32, (n_samples, rows), 0)
    agg = jnp.logical_and(r_i >= s_i * C, r_i < (s_i + 1) * C).astype(jnp.float32)
    ss = jnp.dot(agg, sq, preferred_element_type=jnp.float32)        # (S, cols)
    inv = lax.rsqrt(jnp.maximum(ss, _L2_EPS * _L2_EPS))              # (S, cols)
    r_j = lax.broadcasted_iota(jnp.int32, (rows, n_samples), 0)
    s_j = lax.broadcasted_iota(jnp.int32, (rows, n_samples), 1)
    scat = jnp.logical_and(r_j >= s_j * C, r_j < (s_j + 1) * C).astype(jnp.float32)
    inv_rows = jnp.dot(scat, inv, preferred_element_type=jnp.float32)  # (rows, cols)
    return xn * inv_rows


# ---------------------------------------------------------------------------
# Kernels
# ---------------------------------------------------------------------------
def _fused_kernel(x_ref, w_ref, b_ref, o_ref, *, l2, C, hw_true):
    """Single-pass DomainNorm for a (rows, hw_blk) block holding whole samples."""
    x = x_ref[...].astype(jnp.float32)                    # (rows, hw_blk)
    rows, hw_blk = x.shape

    # Shifted single-pass mean/var (shift = first spatial element per row)
    # to avoid E[x^2] - mean^2 cancellation.
    k = x[:, 0:1]
    xc = x - k
    if hw_blk != hw_true:                                 # lane padding present
        col = lax.broadcasted_iota(jnp.int32, (1, hw_blk), 1)
        xc = jnp.where(col < hw_true, xc, 0.0)
    inv_hw = jnp.float32(1.0 / hw_true)
    m1 = jnp.sum(xc, axis=-1, keepdims=True) * inv_hw
    m2 = jnp.sum(xc * xc, axis=-1, keepdims=True) * inv_hw
    var = jnp.maximum(m2 - m1 * m1, 0.0)
    inv_std = lax.rsqrt(var + _IN_EPS)                    # (rows, 1)
    mean = k + m1                                         # (rows, 1)

    w = w_ref[...].astype(jnp.float32)                    # (rows, 1)
    b = b_ref[...].astype(jnp.float32)                    # (rows, 1)

    if l2:
        xn = x * inv_std + (-mean) * inv_std
        out = _l2_normalize_groups(xn, rows // C, C) * w + b
    else:
        # Fold instance norm + affine into one FMA per element.
        scale = w * inv_std
        out = x * scale + (b - mean * scale)
    o_ref[...] = out.astype(o_ref.dtype)


def _stats_kernel(x_ref, stats_ref, sum_ref, sq_ref, k_ref,
                  *, hw_true, tile_hw, mask_cols):
    """Pass 1 of the HW-tiled path: per-row mean / inv_std accumulated over
    HW tiles (grid = (row_blocks, hw_tiles), hw axis is the reduction)."""
    h = pl.program_id(1)

    @pl.when(h == 0)
    def _init():
        k_ref[...] = x_ref[:, 0:1].astype(jnp.float32)    # per-row shift
        sum_ref[...] = jnp.zeros_like(sum_ref)
        sq_ref[...] = jnp.zeros_like(sq_ref)

    x = x_ref[...].astype(jnp.float32)
    xc = x - k_ref[...]
    if mask_cols:                                         # partial last tile
        col = h * tile_hw + lax.broadcasted_iota(jnp.int32, x.shape, 1)
        xc = jnp.where(col < hw_true, xc, 0.0)
    sum_ref[...] += jnp.sum(xc, axis=-1, keepdims=True)
    sq_ref[...] += jnp.sum(xc * xc, axis=-1, keepdims=True)

    @pl.when(h == pl.num_programs(1) - 1)
    def _finalize():
        inv_hw = jnp.float32(1.0 / hw_true)
        m1 = sum_ref[...] * inv_hw
        m2 = sq_ref[...] * inv_hw
        var = jnp.maximum(m2 - m1 * m1, 0.0)
        stats_ref[:, 0:1] = k_ref[...] + m1               # mean
        stats_ref[:, 1:2] = lax.rsqrt(var + _IN_EPS)      # inv_std


def _normalize_l2_kernel(x_ref, inv_ref, neg_ref, w_ref, b_ref, o_ref, *, C):
    """Pass 2 (l2=True): instance norm with precomputed stats + channel L2 + affine."""
    x = x_ref[...].astype(jnp.float32)
    rows = x.shape[0]
    xn = x * inv_ref[...] + neg_ref[...]
    out = _l2_normalize_groups(xn, rows // C, C) * w_ref[...] + b_ref[...]
    o_ref[...] = out.astype(o_ref.dtype)


def _normalize_plain_kernel(x_ref, scale_ref, shift_ref, o_ref):
    """Pass 2 (l2=False): one folded FMA per element."""
    x = x_ref[...].astype(jnp.float32)
    o_ref[...] = (x * scale_ref[...] + shift_ref[...]).astype(o_ref.dtype)


# ---------------------------------------------------------------------------
# Wrapper-side sizing helpers
# ---------------------------------------------------------------------------
def _physical_vmem_bytes():
    try:
        return int(pltpu.get_tpu_info().vmem_capacity_bytes)
    except Exception:
        return 64 << 20      # conservative fallback (v7x per-TensorCore VMEM)


def _valid_row_blocks(n_rows, C, whole_samples):
    """Row-block sizes that divide n_rows, contain whole samples when needed,
    and satisfy the sublane rule (multiple of 8, or the full extent)."""
    blocks = []
    for rb in range(1, n_rows + 1):
        if n_rows % rb:
            continue
        if whole_samples and rb % C:
            continue
        if rb % 8 and rb != n_rows:
            continue
        blocks.append(rb)
    return blocks


# ---------------------------------------------------------------------------
# Fused (single-pass) path
# ---------------------------------------------------------------------------
def _domain_norm_fused(x2, w_rows, b_rows, *, l2, C, hw_true, row_blocks,
                       vmem_cap, vmem_per_block_byte):
    NR, HWb = x2.shape
    itemsize = jnp.dtype(x2.dtype).itemsize

    rb = max(row_blocks)
    # Prefer >= 2 grid steps (v7x shards "parallel" axes over its 2 TensorCores)
    # as long as blocks stay >= ~2 MiB; on 1-TC chips the extra step is noise.
    if NR // rb < 2:
        multi = [r for r in row_blocks
                 if NR // r >= 2 and r * HWb * itemsize >= (2 << 20)]
        if multi:
            rb = max(multi)
    grid = (NR // rb,)

    block_bytes = rb * HWb * itemsize
    vmem_limit = min(vmem_cap,
                     max(32 << 20,
                         int(block_bytes * vmem_per_block_byte * 1.25) + (2 << 20)))

    n_samples = NR // C
    cost = pl.CostEstimate(
        flops=NR * hw_true * (12 if l2 else 6),
        transcendentals=NR + (n_samples * hw_true if l2 else 0),
        bytes_accessed=2 * NR * hw_true * itemsize + 2 * NR * 4,
    )

    return pl.pallas_call(
        functools.partial(_fused_kernel, l2=l2, C=C, hw_true=hw_true),
        out_shape=jax.ShapeDtypeStruct((NR, HWb), x2.dtype),
        grid_spec=pltpu.PrefetchScalarGridSpec(
            num_scalar_prefetch=0,
            grid=grid,
            in_specs=[
                pl.BlockSpec((rb, HWb), lambda r: (r, 0)),
                pl.BlockSpec((rb, 1), lambda r: (r, 0)),
                pl.BlockSpec((rb, 1), lambda r: (r, 0)),
            ],
            out_specs=pl.BlockSpec((rb, HWb), lambda r: (r, 0)),
        ),
        compiler_params=pltpu.CompilerParams(
            dimension_semantics=("parallel",),
            vmem_limit_bytes=int(vmem_limit),
        ),
        cost_estimate=cost,
    )(x2, w_rows, b_rows)


# ---------------------------------------------------------------------------
# Two-pass (HW-tiled) path for large C*HW
# ---------------------------------------------------------------------------
def _domain_norm_two_pass(x2, w_rows, b_rows, *, l2, C, hw_true, row_blocks,
                          target, vmem_cap):
    NR, HWb = x2.shape
    itemsize = jnp.dtype(x2.dtype).itemsize

    rb = min(row_blocks)
    # HW tile: a multiple of 128, as large as the block budget allows.
    t = max(128, (target // (rb * itemsize)) // 128 * 128)
    t = min(t, pl.cdiv(HWb, 128) * 128)
    n_hw = pl.cdiv(HWb, t)
    n_rb = NR // rb
    mask_cols = (n_hw * t != hw_true)
    tile_bytes = rb * t * itemsize

    # ---- pass 1: per-row mean / inv_std --------------------------------
    vmem1 = min(vmem_cap, max(32 << 20, 3 * tile_bytes + 2 * rb * t * 4 + (2 << 20)))
    stats = pl.pallas_call(
        functools.partial(_stats_kernel, hw_true=hw_true, tile_hw=t,
                          mask_cols=mask_cols),
        out_shape=jax.ShapeDtypeStruct((NR, 2), jnp.float32),
        grid_spec=pltpu.PrefetchScalarGridSpec(
            num_scalar_prefetch=0,
            grid=(n_rb, n_hw),
            in_specs=[pl.BlockSpec((rb, t), lambda r, h: (r, h))],
            out_specs=pl.BlockSpec((rb, 2), lambda r, h: (r, 0)),
            scratch_shapes=[pltpu.VMEM((rb, 1), jnp.float32)] * 3,
        ),
        compiler_params=pltpu.CompilerParams(
            dimension_semantics=("parallel", "arbitrary"),
            vmem_limit_bytes=int(vmem1),
        ),
    )(x2)

    mean = stats[:, 0:1]
    inv_std = stats[:, 1:2]

    # ---- pass 2: normalize (+ L2 + affine) ------------------------------
    x_spec = pl.BlockSpec((rb, t), lambda r, h: (r, h))
    row_spec = pl.BlockSpec((rb, 1), lambda r, h: (r, 0))
    if l2:
        kernel = functools.partial(_normalize_l2_kernel, C=C)
        extra = (inv_std, -mean * inv_std, w_rows, b_rows)
        n_temps = 5
    else:
        scale = w_rows * inv_std
        kernel = _normalize_plain_kernel
        extra = (scale, b_rows - mean * scale)
        n_temps = 2
    vmem2 = min(vmem_cap, max(32 << 20,
                              4 * tile_bytes + n_temps * rb * t * 4 + (2 << 20)))
    return pl.pallas_call(
        kernel,
        out_shape=jax.ShapeDtypeStruct((NR, HWb), x2.dtype),
        grid_spec=pltpu.PrefetchScalarGridSpec(
            num_scalar_prefetch=0,
            grid=(n_rb, n_hw),
            in_specs=[x_spec] + [row_spec] * len(extra),
            out_specs=pl.BlockSpec((rb, t), lambda r, h: (r, h)),
        ),
        compiler_params=pltpu.CompilerParams(
            dimension_semantics=("parallel", "parallel"),
            vmem_limit_bytes=int(vmem2),
        ),
    )(x2, *extra)


# ---------------------------------------------------------------------------
# Public entry point
# ---------------------------------------------------------------------------
def domain_norm(x, weight, bias, *, l2=True, max_block_bytes=None):
    """DomainNorm forward.  x: (N, C, H, W); weight/bias broadcastable to (1, C, 1, 1)."""
    N, C, H, W = x.shape
    HW = H * W
    NR = N * C
    itemsize = jnp.dtype(x.dtype).itemsize

    # Lane padding only for very small spatial extents (narrow masked stores
    # otherwise dominate); for HW >= 128 the exact HW is kept as the full-extent
    # last block dim -- no pad/slice HBM round trip.
    HWb = 128 if HW < 128 else HW
    x2 = x.reshape(NR, HW)
    if HWb != HW:
        x2 = jnp.pad(x2, ((0, 0), (0, HWb - HW)))

    w_rows = jnp.tile(jnp.reshape(weight, (C,)).astype(jnp.float32), N).reshape(NR, 1)
    b_rows = jnp.tile(jnp.reshape(bias, (C,)).astype(jnp.float32), N).reshape(NR, 1)

    # Block budget: generation aware (derived from physical VMEM with headroom
    # for double-buffered in/out in the input dtype + f32 in-kernel temps).
    vmem_cap = _physical_vmem_bytes()
    n_f32_temps = 5 if l2 else 2
    vmem_per_block_byte = 4.0 + n_f32_temps * 4.0 / itemsize
    target = max(1 << 20, min(8 << 20,
                              int((vmem_cap - (8 << 20)) / vmem_per_block_byte)))
    if max_block_bytes is not None:
        target = min(target, int(max_block_bytes))

    row_blocks = _valid_row_blocks(NR, C, whole_samples=l2)
    fits = [rb for rb in row_blocks if rb * HWb * itemsize <= target]

    if fits:
        out2 = _domain_norm_fused(
            x2, w_rows, b_rows, l2=l2, C=C, hw_true=HW, row_blocks=fits,
            vmem_cap=vmem_cap, vmem_per_block_byte=vmem_per_block_byte)
    else:
        out2 = _domain_norm_two_pass(
            x2, w_rows, b_rows, l2=l2, C=C, hw_true=HW, row_blocks=row_blocks,
            target=target, vmem_cap=vmem_cap)

    if HWb != HW:
        out2 = out2[:, :HW]
    return out2.reshape(N, C, H, W)


# ---------------------------------------------------------------------------
# Pure-JAX reference mirroring the PyTorch forward
# ---------------------------------------------------------------------------
def _reference(x, weight, bias, *, l2=True):
    x = x.astype(jnp.float32)
    mean = jnp.mean(x, axis=(2, 3), keepdims=True)
    var = jnp.mean((x - mean) ** 2, axis=(2, 3), keepdims=True)
    xn = (x - mean) / jnp.sqrt(var + _IN_EPS)
    if l2:
        norm = jnp.sqrt(jnp.sum(xn * xn, axis=1, keepdims=True))
        xn = xn / jnp.maximum(norm, _L2_EPS)
    return xn * weight.reshape(1, -1, 1, 1) + bias.reshape(1, -1, 1, 1)


if __name__ == "__main__":
    key = jax.random.PRNGKey(0)
    keys = jax.random.split(key, 8)

    def check(out, ref, tol=3e-5):
        assert out.shape == ref.shape
        assert bool(jnp.allclose(out, ref, atol=tol, rtol=tol)), \
            float(jnp.max(jnp.abs(out - ref)))

    # 1) primary: module init (weight=1, bias=0), l2=True, fused path
    N, C, H, W = 2, 4, 16, 16
    x = jax.random.normal(keys[0], (N, C, H, W), dtype=jnp.float32)
    w1 = jnp.ones((1, C, 1, 1), jnp.float32)
    b1 = jnp.zeros((1, C, 1, 1), jnp.float32)
    out = jax.block_until_ready(domain_norm(x, w1, b1, l2=True))
    check(out, _reference(x, w1, b1, l2=True))

    # 2) l2=False with non-trivial affine (folded FMA path)
    w2 = 1.0 + 0.1 * jax.random.normal(keys[1], (1, C, 1, 1), jnp.float32)
    b2 = 0.1 * jax.random.normal(keys[2], (1, C, 1, 1), jnp.float32)
    out = jax.block_until_ready(domain_norm(x, w2, b2, l2=False))
    check(out, _reference(x, w2, b2, l2=False))

    # 3) HW not a multiple of 128 (no padding, masked tails) + offset mean
    x3 = 5.0 + jax.random.normal(keys[3], (3, 8, 14, 14), dtype=jnp.float32)
    w3 = jnp.ones((1, 8, 1, 1), jnp.float32)
    b3 = jnp.zeros((1, 8, 1, 1), jnp.float32)
    out = jax.block_until_ready(domain_norm(x3, w3, b3, l2=True))
    check(out, _reference(x3, w3, b3, l2=True))

    # 4) tiny spatial extent (HW < 128 -> lane-pad path)
    x4 = jax.random.normal(keys[4], (2, 4, 8, 8), dtype=jnp.float32)
    out = jax.block_until_ready(domain_norm(x4, w1, b1, l2=True))
    check(out, _reference(x4, w1, b1, l2=True))

    # 5) forced two-pass HW-tiled path (partial last tile, 1-sample row blocks)
    x5 = jax.random.normal(keys[5], (2, 8, 30, 30), dtype=jnp.float32)
    w5 = 1.0 + 0.1 * jax.random.normal(keys[6], (1, 8, 1, 1), jnp.float32)
    b5 = 0.1 * jax.random.normal(keys[7], (1, 8, 1, 1), jnp.float32)
    out = jax.block_until_ready(
        domain_norm(x5, w5, b5, l2=True, max_block_bytes=16 * 1024))
    check(out, _reference(x5, w5, b5, l2=True))
    out = jax.block_until_ready(
        domain_norm(x5, w5, b5, l2=False, max_block_bytes=16 * 1024))
    check(out, _reference(x5, w5, b5, l2=False))

    # 6) forced two-pass with multi-sample row blocks (C=4 -> MXU group reduce)
    x6 = jax.random.normal(keys[0], (2, 4, 32, 32), dtype=jnp.float32)
    out = jax.block_until_ready(
        domain_norm(x6, w1, b1, l2=True, max_block_bytes=16 * 1024))
    check(out, _reference(x6, w1, b1, l2=True))

    print("KERNEL_OK")
</pallas_src>

<mosaic_0001>
module attributes {stable_mosaic.version = 11 : i64} {
  func.func @_fused_kernel(%arg0: i32, %arg1: memref<8x256xf32, #tpu.memory_space<vmem>>, %arg2: memref<8x1xf32, #tpu.memory_space<vmem>>, %arg3: memref<8x1xf32, #tpu.memory_space<vmem>>, %arg4: memref<8x256xf32, #tpu.memory_space<vmem>>) attributes {dimension_semantics = [#tpu.dimension_semantics<parallel>], iteration_bounds = array<i64: 1>, scalar_prefetch = 0 : i64, scratch_operands = 0 : i64, tpu.core_type = #tpu.core_type<tc>, window_params = [{transform_indices = @transform_0, window_bounds = array<i64: 8, 256>}, {transform_indices = @transform_1, window_bounds = array<i64: 8, 1>}, {transform_indices = @transform_2, window_bounds = array<i64: 8, 1>}, {transform_indices = @transform_3, window_bounds = array<i64: 8, 256>}]} {
    %c0 = arith.constant 0 : index
    %c0_0 = arith.constant 0 : index
    %0 = vector.load %arg1[%c0, %c0_0] : memref<8x256xf32, #tpu.memory_space<vmem>>, vector<8x256xf32>
    %1 = vector.extract_strided_slice %0 {offsets = [0, 0], sizes = [8, 1], strides = [1, 1]} : vector<8x256xf32> to vector<8x1xf32>
    %2 = vector.broadcast %1 : vector<8x1xf32> to vector<8x256xf32>
    %3 = arith.subf %0, %2 : vector<8x256xf32>
    %cst = arith.constant dense<0.000000e+00> : vector<8xf32>
    %4 = vector.multi_reduction <add>, %3, %cst [1] : vector<8x256xf32> to vector<8xf32>
    %5 = vector.shape_cast %4 : vector<8xf32> to vector<8x1xf32>
    %cst_1 = arith.constant 3.906250e-03 : f32
    %6 = vector.broadcast %cst_1 : f32 to vector<8x1xf32>
    %7 = arith.mulf %5, %6 : vector<8x1xf32>
    %8 = arith.mulf %3, %3 : vector<8x256xf32>
    %cst_2 = arith.constant dense<0.000000e+00> : vector<8xf32>
    %9 = vector.multi_reduction <add>, %8, %cst_2 [1] : vector<8x256xf32> to vector<8xf32>
    %10 = vector.shape_cast %9 : vector<8xf32> to vector<8x1xf32>
    %cst_3 = arith.constant 3.906250e-03 : f32
    %11 = vector.broadcast %cst_3 : f32 to vector<8x1xf32>
    %12 = arith.mulf %10, %11 : vector<8x1xf32>
    %13 = arith.mulf %7, %7 : vector<8x1xf32>
    %14 = arith.subf %12, %13 : vector<8x1xf32>
    %cst_4 = arith.constant 0.000000e+00 : f32
    %15 = vector.broadcast %cst_4 : f32 to vector<8x1xf32>
    %16 = arith.maximumf %14, %15 : vector<8x1xf32>
    %cst_5 = arith.constant 9.99999974E-6 : f32
    %17 = vector.broadcast %cst_5 : f32 to vector<8x1xf32>
    %18 = arith.addf %16, %17 : vector<8x1xf32>
    %19 = math.rsqrt %18 : vector<8x1xf32>
    %20 = arith.addf %1, %7 : vector<8x1xf32>
    %c0_6 = arith.constant 0 : index
    %c0_7 = arith.constant 0 : index
    %21 = vector.load %arg2[%c0_6, %c0_7] : memref<8x1xf32, #tpu.memory_space<vmem>>, vector<8x1xf32>
    %c0_8 = arith.constant 0 : index
    %c0_9 = arith.constant 0 : index
    %22 = vector.load %arg3[%c0_8, %c0_9] : memref<8x1xf32, #tpu.memory_space<vmem>>, vector<8x1xf32>
    %23 = vector.broadcast %19 : vector<8x1xf32> to vector<8x256xf32>
    %24 = arith.mulf %0, %23 : vector<8x256xf32>
    %cst_10 = arith.constant 0.000000e+00 : f32
    %25 = vector.broadcast %cst_10 : f32 to vector<8x1xf32>
    %26 = arith.subf %25, %20 : vector<8x1xf32>
    %27 = arith.mulf %26, %19 : vector<8x1xf32>
    %28 = vector.broadcast %27 : vector<8x1xf32> to vector<8x256xf32>
    %29 = arith.addf %24, %28 : vector<8x256xf32>
    %30 = arith.mulf %29, %29 : vector<8x256xf32>
    %31 = tpu.iota {dimensions = array<i32: 1>} : vector<2x8xi32>
    %32 = tpu.iota {dimensions = array<i32: 0>} : vector<2x8xi32>
    %c4_i32 = arith.constant 4 : i32
    %33 = vector.broadcast %c4_i32 : i32 to vector<2x8xi32>
    %34 = arith.muli %32, %33 : vector<2x8xi32>
    %35 = arith.cmpi sge, %31, %34 : vector<2x8xi32>
    %c1_i32 = arith.constant 1 : i32
    %36 = vector.broadcast %c1_i32 : i32 to vector<2x8xi32>
    %37 = arith.addi %32, %36 : vector<2x8xi32>
    %c4_i32_11 = arith.constant 4 : i32
    %38 = vector.broadcast %c4_i32_11 : i32 to vector<2x8xi32>
    %39 = arith.muli %37, %38 : vector<2x8xi32>
    %40 = arith.cmpi slt, %31, %39 : vector<2x8xi32>
    %41 = arith.andi %35, %40 : vector<2x8xi1>
    %42 = arith.extui %41 : vector<2x8xi1> to vector<2x8xi32>
    %43 = arith.sitofp %42 : vector<2x8xi32> to vector<2x8xf32>
    %cst_12 = arith.constant dense<0.000000e+00> : vector<2x256xf32>
    %44 = tpu.matmul %43, %30, %cst_12 {dimension_numbers = #tpu.dot_dimension_numbers<[1], [0], [0], [1], [0, 0, 1, 1], [], []>} : vector<2x8xf32>, vector<8x256xf32>, vector<2x256xf32> -> vector<2x256xf32>
    %cst_13 = arith.constant 1.000000e-24 : f32
    %45 = vector.broadcast %cst_13 : f32 to vector<2x256xf32>
    %46 = arith.maximumf %44, %45 : vector<2x256xf32>
    %47 = math.rsqrt %46 : vector<2x256xf32>
    %48 = tpu.iota {dimensions = array<i32: 0>} : vector<8x2xi32>
    %49 = tpu.iota {dimensions = array<i32: 1>} : vector<8x2xi32>
    %c4_i32_14 = arith.constant 4 : i32
    %50 = vector.broadcast %c4_i32_14 : i32 to vector<8x2xi32>
    %51 = arith.muli %49, %50 : vector<8x2xi32>
    %52 = arith.cmpi sge, %48, %51 : vector<8x2xi32>
    %c1_i32_15 = arith.constant 1 : i32
    %53 = vector.broadcast %c1_i32_15 : i32 to vector<8x2xi32>
    %54 = arith.addi %49, %53 : vector<8x2xi32>
    %c4_i32_16 = arith.constant 4 : i32
    %55 = vector.broadcast %c4_i32_16 : i32 to vector<8x2xi32>
    %56 = arith.muli %54, %55 : vector<8x2xi32>
    %57 = arith.cmpi slt, %48, %56 : vector<8x2xi32>
    %58 = arith.andi %52, %57 : vector<8x2xi1>
    %59 = arith.extui %58 : vector<8x2xi1> to vector<8x2xi32>
    %60 = arith.sitofp %59 : vector<8x2xi32> to vector<8x2xf32>
    %cst_17 = arith.constant dense<0.000000e+00> : vector<8x256xf32>
    %61 = tpu.matmul %60, %47, %cst_17 {dimension_numbers = #tpu.dot_dimension_numbers<[1], [0], [0], [1], [0, 0, 1, 1], [], []>} : vector<8x2xf32>, vector<2x256xf32>, vector<8x256xf32> -> vector<8x256xf32>
    %62 = arith.mulf %29, %61 : vector<8x256xf32>
    %63 = vector.broadcast %21 : vector<8x1xf32> to vector<8x256xf32>
    %64 = arith.mulf %62, %63 : vector<8x256xf32>
    %65 = vector.broadcast %22 : vector<8x1xf32> to vector<8x256xf32>
    %66 = arith.addf %64, %65 : vector<8x256xf32>
    %c0_18 = arith.constant 0 : index
    %c0_19 = arith.constant 0 : index
    %67 = vector.load %arg4[%c0_18, %c0_19] : memref<8x256xf32, #tpu.memory_space<vmem>>, vector<8x256xf32>
    tpu.vector_store %arg4[%c0_18, %c0_19], %66 {strides = array<i32>} : memref<8x256xf32, #tpu.memory_space<vmem>>, vector<8x256xf32>,
    return
  }
  func.func @transform_0(%arg0: i32) -> (i32, i32) {
    %c0_i32 = arith.constant 0 : i32
    %c0_i32_0 = arith.constant 0 : i32
    return %arg0, %c0_i32 : i32, i32
  }
  func.func @transform_1(%arg0: i32) -> (i32, i32) {
    %c0_i32 = arith.constant 0 : i32
    %c0_i32_0 = arith.constant 0 : i32
    return %arg0, %c0_i32 : i32, i32
  }
  func.func @transform_2(%arg0: i32) -> (i32, i32) {
    %c0_i32 = arith.constant 0 : i32
    %c0_i32_0 = arith.constant 0 : i32
    return %arg0, %c0_i32 : i32, i32
  }
  func.func @transform_3(%arg0: i32) -> (i32, i32) {
    %c0_i32 = arith.constant 0 : i32
    %c0_i32_0 = arith.constant 0 : i32
    return %arg0, %c0_i32 : i32, i32
  }
}

</mosaic_0001>

<llo_original>
// kernel: tpu_custom_call.1
$region0: #{tpu_custom_call.1}
  #allocation0 [shape = 'u32[]', space=smem, size = 0x4, offset = 0x4, fixed_abs, tag = 'smem constant byte address 0x4 - core index']
  #allocation1 [shape = 'u32[72,128]{1,0:T(1,128)}', space=vmem, size = 0x9000, scoped, tag = 'internal scratch']
  %s0 = inlined_call_operand.vmem [shape: f32[8,256], index: 0, kind: input, shape index: {}]
  %s1 = inlined_call_operand.vmem [shape: f32[8,1], index: 1, kind: input, shape index: {}]
  %s2 = inlined_call_operand.vmem [shape: f32[8,1], index: 2, kind: input, shape index: {}]
  %s3 = inlined_call_operand.hbm [shape: f32[8,256], index: 3, kind: output, shape index: {}]
  %s4 = sld [smem:[#allocation0]]
  $region22: #{tpu_custom_call.1} parent=0
    _
  %s6 = ssub.s32 1, %s4
  %s7 = scalar_select 0, %s6, %s4
  $region1: #{tpu_custom_call.1} parent=0
    #allocation2 [shape = 'u8[8192]{0}', space=vmem, size = 0x2000, scoped, tag = 'output window, operand 0, single buffered']
    #allocation3 [shape = 's32[1]{0}', space=sflag, size = 0x4, scoped, tag = 'scoped memory for tpu_custom_call.1']
    %8 = vsyncpa [#allocation3], 0
    // Predicated region
    $region2: #{tpu_custom_call.1} parent=1 // pred_check
      _
    $region3: #{tpu_custom_call.1} parent=1 // pred_check_branch
      %10 = sbr.rel (0) target = $region5
    $region4: #{tpu_custom_call.1} parent=1 // pred_region
      _
    $region5: #{tpu_custom_call.1} parent=1 // pred_fallthru
      _
    // Predicated region
    $region6: #{tpu_custom_call.1} parent=1 // pred_check
      _
    $region7: #{tpu_custom_call.1} parent=1 // pred_check_branch
      %12 = sbr.rel (0) target = $region9
    $region8: #{tpu_custom_call.1} parent=1 // pred_region
      _
    $region9: #{tpu_custom_call.1} parent=1 // pred_fallthru
      _
    // Predicated region
    $region10: #{tpu_custom_call.1} parent=1 // pred_check
      _
    $region11: #{tpu_custom_call.1} parent=1 // pred_check_branch
      %14 = sbr.rel (0) target = $region13
    $region12: #{tpu_custom_call.1} parent=1 // pred_region
      _
    $region13: #{tpu_custom_call.1} parent=1 // pred_fallthru
      _
    %v15 = vld [vmem:[%s0] sm:$0xff]
    %v16 = vld [vmem:[%s0 + $0x8] sm:$0xff]
    %18 = vset.pattern.permute.xlu0 0
    %19 = vperm.xlu0 %18, %v15
    %v20 = vpop.permute.xlu0 %19
    %v22 = vsub.f32 %v15, %v20
    %v23 = vsub.f32 %v16, %v20
    %v24 = vadd.f32 %v22, %v23
    %25 = vadd.xlane.f32.xlu0 %v24
    %v26 = vpop.xlane.xlu0 %25
    %v27 = vmul.f32 %v26, 0.00390625
    %v28 = vmul.f32 %v22, %v22
    %v29 = vmul.f32 %v23, %v23
    %v30 = vadd.f32 %v28, %v29
    %31 = vadd.xlane.f32.xlu0 %v30
    %v32 = vpop.xlane.xlu0 %31
    %v33 = vmul.f32 %v32, 0.00390625
    %v34 = vmul.f32 %v27, %v27
    %v35 = vsub.f32 %v33, %v34
    %v36 = vmax.f32 %v35, 0.0
    %v37 = vadd.f32 %v36, 1e-05
    %v38 = vrsqrt.pop %v37
    %v39 = vmul.f32 %v38, %v37
    %v40 = vmul.f32 %v39, %v38
    %v41 = vmul.f32 0.5, %v40
    %v42 = vsub.f32 1.5, %v41
    %v43 = vmul.f32 %v38, %v42
    %vm44 = vweird.f32 %v37
    %vm45 = vweird.f32 %v38
    %vm46 = vmor %vm44, %vm45
    %v47 = vsel %vm46, %v38, %v43
    %v48 = vadd.f32 %v15, %v27
    %v49 = vld [vmem:[%s1] sm:$0xff]
    %v50 = vld [vmem:[%s2] sm:$0xff]
    %v51 = vmul.f32 %v15, %v47
    %v52 = vmul.f32 %v16, %v47
    %v53 = vsub.f32 0.0, %v48
    %v54 = vmul.f32 %v53, %v47
    %56 = vset.pattern.permute.xlu0 0
    %57 = vperm.xlu0 %56, %v54
    %v58 = vpop.permute.xlu0 %57
    %v60 = vadd.f32 %v51, %v58
    %v61 = vadd.f32 %v52, %v58
    %v62 = vmul.f32 %v60, %v60
    %v63 = vmul.f32 %v61, %v61
    %v64 = vlaneseq
    %v65 = vand.u32 %v64, 127
    %v66 = vlaneseq
    %v67 = vshrl.u32 %v66, 7
    %v68 = vmul.u32 %v67, 4
    %vm69 = vcmp.ge.s32.totalorder %v65, %v68
    %v70 = vadd.s32 %v67, 1
    %v71 = vmul.u32 %v70, 4
    %vm72 = vcmp.lt.s32.totalorder %v65, %v71
    %vm73 = vmand %vm69, %vm72
    %v74 = vsel %vm73, 1, 0
    %v75 = vcvt.s32.f32 %v74
    %vm76 = vcmask 64512
    %v78 = vsel %vm76, %v75, 0
    %80 = vmatpush.msra.mxu0 0.0
    %81 = vmatpush.msra.mxu0 0.0
    %82 = vmatpush.msra.mxu0 0.0
    %83 = vmatpush.msra.mxu0 0.0
    %84 = vmatpush.msra.mxu0 0.0
    %85 = vmatpush.msra.mxu0 0.0
    %86 = vmatpush.msra.mxu0 0.0
    %87 = vmatpush.msra.mxu0 0.0
    %88 = vmatpush.msra.mxu0 0.0
    %89 = vmatpush.msra.mxu0 0.0
    %90 = vmatpush.msra.mxu0 0.0
    %91 = vmatpush.msra.mxu0 0.0
    %92 = vmatpush.msra.mxu0 0.0
    %93 = vmatpush.msra.mxu0 0.0
    %94 = vmatpush.msra.mxu0 0.0
    %95 = vmatpush.msra.mxu0 %v62
    %96 = vmatmul.f32.gmra.mxu0 %v78
    %v97 = vpop.f32.mrf.mxu0
    %v98 = vadd.f32 0.0, %v97
    %99 = vdwg.mxu0
    %100 = vmatpush.msra.mxu0 0.0
    %101 = vmatpush.msra.mxu0 0.0
    %102 = vmatpush.msra.mxu0 0.0
    %103 = vmatpush.msra.mxu0 0.0
    %104 = vmatpush.msra.mxu0 0.0
    %105 = vmatpush.msra.mxu0 0.0
    %106 = vmatpush.msra.mxu0 0.0
    %107 = vmatpush.msra.mxu0 0.0
    %108 = vmatpush.msra.mxu0 0.0
    %109 = vmatpush.msra.mxu0 0.0
    %110 = vmatpush.msra.mxu0 0.0
    %111 = vmatpush.msra.mxu0 0.0
    %112 = vmatpush.msra.mxu0 0.0
    %113 = vmatpush.msra.mxu0 0.0
    %114 = vmatpush.msra.mxu0 0.0
    %115 = vmatpush.msra.mxu0 %v63
    %116 = vmatmul.f32.gmra.mxu0 %v78
    %v117 = vpop.f32.mrf.mxu0
    %v118 = vadd.f32 0.0, %v117
    %119 = vdwg.mxu0
    %v120 = vmax.f32 %v98, 1e-24
    %v121 = vmax.f32 %v118, 1e-24
    %v122 = vrsqrt.pop %v120
    %v123 = vmul.f32 %v122, %v120
    %v124 = vmul.f32 %v123, %v122
    %v125 = vmul.f32 0.5, %v124
    %v126 = vsub.f32 1.5, %v125
    %v127 = vmul.f32 %v122, %v126
    %vm128 = vweird.f32 %v120
    %vm129 = vweird.f32 %v122
    %vm130 = vmor %vm128, %vm129
    %v131 = vsel %vm130, %v122, %v127
    %v132 = vrsqrt.pop %v121
    %v133 = vmul.f32 %v132, %v121
    %v134 = vmul.f32 %v133, %v132
    %v135 = vmul.f32 0.5, %v134
    %v136 = vsub.f32 1.5, %v135
    %v137 = vmul.f32 %v132, %v136
    %vm138 = vweird.f32 %v121
    %vm139 = vweird.f32 %v132
    %vm140 = vmor %vm138, %vm139
    %v141 = vsel %vm140, %v132, %v137
    %v142 = vmul.u32 %v65, 4
    %vm143 = vcmp.ge.s32.totalorder %v67, %v142
    %v144 = vadd.s32 %v65, 1
    %v145 = vmul.u32 %v144, 4
    %vm146 = vcmp.lt.s32.totalorder %v67, %v145
    %vm147 = vmand %vm143, %vm146
    %v148 = vsel %vm147, 1, 0
    %v149 = vcvt.s32.f32 %v148
    %vm150 = vcmask 15360
    %v152 = vsel %vm150, %v149, 0
    %vm154 = vcmask 1041408
    %v156 = vsel %vm154, %v131, 0
    %v159 = vsel %vm154, %v141, 0
    %161 = vmatpush.msra.mxu0 0.0
    %162 = vmatpush.msra.mxu0 0.0
    %163 = vmatpush.msra.mxu0 0.0
    %164 = vmatpush.msra.mxu0 0.0
    %165 = vmatpush.msra.mxu0 0.0
    %166 = vmatpush.msra.mxu0 0.0
    %167 = vmatpush.msra.mxu0 0.0
    %168 = vmatpush.msra.mxu0 0.0
    %169 = vmatpush.msra.mxu0 0.0
    %170 = vmatpush.msra.mxu0 0.0
    %171 = vmatpush.msra.mxu0 0.0
    %172 = vmatpush.msra.mxu0 0.0
    %173 = vmatpush.msra.mxu0 0.0
    %174 = vmatpush.msra.mxu0 0.0
    %175 = vmatpush.msra.mxu0 0.0
    %176 = vmatpush.msra.mxu0 %v156
    %177 = vmatmul.f32.gmra.mxu0 %v152
    %v178 = vpop.f32.mrf.mxu0
    %v179 = vadd.f32 0.0, %v178
    %180 = vdwg.mxu0
    %181 = vmatpush.msra.mxu0 0.0
    %182 = vmatpush.msra.mxu0 0.0
    %183 = vmatpush.msra.mxu0 0.0
    %184 = vmatpush.msra.mxu0 0.0
    %185 = vmatpush.msra.mxu0 0.0
    %186 = vmatpush.msra.mxu0 0.0
    %187 = vmatpush.msra.mxu0 0.0
    %188 = vmatpush.msra.mxu0 0.0
    %189 = vmatpush.msra.mxu0 0.0
    %190 = vmatpush.msra.mxu0 0.0
    %191 = vmatpush.msra.mxu0 0.0
    %192 = vmatpush.msra.mxu0 0.0
    %193 = vmatpush.msra.mxu0 0.0
    %194 = vmatpush.msra.mxu0 0.0
    %195 = vmatpush.msra.mxu0 0.0
    %196 = vmatpush.msra.mxu0 %v159
    %197 = vmatmul.f32.gmra.mxu0 %v152
    %v198 = vpop.f32.mrf.mxu0
    %v199 = vadd.f32 0.0, %v198
    %200 = vdwg.mxu0
    %v201 = vmul.f32 %v60, %v179
    %v202 = vmul.f32 %v61, %v199
    %204 = vset.pattern.permute.xlu0 0
    %205 = vperm.xlu0 %204, %v49
    %v206 = vpop.permute.xlu0 %205
    %v208 = vmul.f32 %v201, %v206
    %v209 = vmul.f32 %v202, %v206
    %211 = vset.pattern.permute.xlu0 0
    %212 = vperm.xlu0 %211, %v50
    %v213 = vpop.permute.xlu0 %212
    %v215 = vadd.f32 %v208, %v213
    %v216 = vadd.f32 %v209, %v213
    %217 = vst [vmem:[#allocation2] sm:$0xff] %v215
    %218 = vst [vmem:[#allocation2 + $0x8] sm:$0xff] %v216
    // Predicated region
    $region14: #{tpu_custom_call.1} parent=1 // pred_check
      _
    $region15: #{tpu_custom_call.1} parent=1 // pred_check_branch
      %220 = sbr.rel (0) target = $region17
    $region16: #{tpu_custom_call.1} parent=1 // pred_region
      %222 = vsyncadd [#allocation3], 0
      %s224 = sshll.u32 [#allocation2], 4
      %s225 = int_to_ptr.vmem [resolvable:$true] %s224
      %s226 = sshll.u32 %s3, 4
      %s227 = int_to_ptr.hbm [resolvable:$true] %s226
      %229 = dma.vmem_to_hbm [thread:$0]  %s225, 256, %s227, [#allocation3]
    $region17: #{tpu_custom_call.1} parent=1 // pred_fallthru
      _
    // Predicated region
    $region18: #{tpu_custom_call.1} parent=1 // pred_check
      _
    $region19: #{tpu_custom_call.1} parent=1 // pred_check_branch
      %231 = sbr.rel (0) target = $region21
    $region20: #{tpu_custom_call.1} parent=1 // pred_region
      %233 = dma.done [#allocation3], 256
    $region21: #{tpu_custom_call.1} parent=1 // pred_fallthru
      _
    %234 = vsyncpa [#allocation3], 1

</llo_original>
